<compile_context>
chip_gen: v6e
topology: v6e:2x2x1
jax: 0.10.0
libtpu: 0.0.40
codegen_flags: <defaults>
</compile_context>

<pallas_src>
import functools

import jax
import jax.numpy as jnp
from jax.experimental import pallas as pl
from jax.experimental.pallas import tpu as pltpu

BN_EPS = 1e-3


def _round_up(x, m):
    return ((x + m - 1) // m) * m


def _pick_divisor(size, candidates=(512, 256, 128)):
    """Largest candidate tile that evenly divides `size` (size is a mult. of 128)."""
    for t in candidates:
        if size % t == 0:
            return t
    return size


def _tile_rows(m, cap=256):
    """Row-tile size (multiple of 8, capped) and padded row count."""
    tm = min(cap, _round_up(m, 8))
    return tm, _round_up(m, tm)


# --------------------------------------------------------------------------
# Pallas kernels (hot path)
# --------------------------------------------------------------------------

def _matmul_bias_silu_kernel(a_ref, w_ref, b_ref, o_ref, acc_ref):
    """o = SiLU(A @ W + bias); K reduced over the innermost grid axis."""

    @pl.when(pl.program_id(2) == 0)
    def _():
        acc_ref[...] = jnp.zeros_like(acc_ref)

    acc_ref[...] += jnp.dot(a_ref[...], w_ref[...],
                            preferred_element_type=jnp.float32)

    @pl.when(pl.program_id(2) == pl.num_programs(2) - 1)
    def _():
        y = acc_ref[...] + b_ref[...]
        sig = pl.reciprocal(1.0 + jnp.exp(-y), approx=True)   # EUP slot
        o_ref[...] = (y * sig).astype(o_ref.dtype)


def matmul_bias_silu(a, w, bias, out_dtype=jnp.bfloat16):
    """a: (M, K), w: (K, N) [BN scale pre-folded], bias: (1, N) -> (M, N)."""
    m, k = a.shape
    _, n = w.shape
    tm, mp = _tile_rows(m, cap=256)
    np_ = _round_up(n, 128)
    tn = _pick_divisor(np_)
    kp = _round_up(k, 128)
    tk = _pick_divisor(kp)
    a_p = jnp.pad(a.astype(jnp.bfloat16), ((0, mp - m), (0, kp - k)))
    w_p = jnp.pad(w.astype(jnp.bfloat16), ((0, kp - k), (0, np_ - n)))
    b_p = jnp.pad(bias.astype(jnp.float32), ((0, 0), (0, np_ - n)))
    out = pl.pallas_call(
        _matmul_bias_silu_kernel,
        out_shape=jax.ShapeDtypeStruct((mp, np_), out_dtype),
        grid=(mp // tm, np_ // tn, kp // tk),
        in_specs=[
            pl.BlockSpec((tm, tk), lambda i, j, kk: (i, kk)),
            pl.BlockSpec((tk, tn), lambda i, j, kk: (kk, j)),
            pl.BlockSpec((1, tn), lambda i, j, kk: (0, j)),
        ],
        out_specs=pl.BlockSpec((tm, tn), lambda i, j, kk: (i, j)),
        scratch_shapes=[pltpu.VMEM((tm, tn), jnp.float32)],
        compiler_params=pltpu.CompilerParams(
            dimension_semantics=("parallel", "parallel", "arbitrary")),
    )(a_p, w_p, b_p)
    return out[:m, :n]


def _dw_bias_silu_kernel(p_ref, w_ref, b_ref, o_ref):
    """Depthwise 3x3: o = SiLU(sum_t taps[t] * w[t] + bias), f32 tap math."""
    acc = p_ref[0].astype(jnp.float32) * w_ref[0]
    for t in range(1, 9):
        acc = acc + p_ref[t].astype(jnp.float32) * w_ref[t]
    y = acc + b_ref[...]
    sig = pl.reciprocal(1.0 + jnp.exp(-y), approx=True)
    o_ref[...] = (y * sig).astype(o_ref.dtype)


def depthwise3x3_bias_silu(x, w, bias, out_dtype=jnp.bfloat16):
    """x: (N, H, W, C) NHWC; depthwise k=3, s=1, p=1, groups=C, fused bias+SiLU."""
    n, h, wd, c = x.shape
    xp = jnp.pad(x.astype(jnp.bfloat16), ((0, 0), (1, 1), (1, 1), (0, 0)))
    taps = [xp[:, dy:dy + h, dx:dx + wd, :].reshape(n * h * wd, c)
            for dy in range(3) for dx in range(3)]
    pmat = jnp.stack(taps, axis=0)                      # (9, M, C) bf16
    m = n * h * wd
    tm, mp = _tile_rows(m, cap=512)
    cp = _round_up(c, 128)
    p_p = jnp.pad(pmat, ((0, 0), (0, mp - m), (0, cp - c)))
    w_p = jnp.pad(w.reshape(9, 1, c).astype(jnp.float32),
                  ((0, 0), (0, 0), (0, cp - c)))
    b_p = jnp.pad(bias.astype(jnp.float32), ((0, 0), (0, cp - c)))
    out = pl.pallas_call(
        _dw_bias_silu_kernel,
        out_shape=jax.ShapeDtypeStruct((mp, cp), out_dtype),
        grid=(mp // tm,),
        in_specs=[
            pl.BlockSpec((9, tm, cp), lambda i: (0, i, 0)),
            pl.BlockSpec((9, 1, cp), lambda i: (0, 0, 0)),
            pl.BlockSpec((1, cp), lambda i: (0, 0)),
        ],
        out_specs=pl.BlockSpec((tm, cp), lambda i: (0, i)),
        compiler_params=pltpu.CompilerParams(dimension_semantics=("parallel",)),
    )(p_p, w_p, b_p)
    return out[:m, :c].reshape(n, h, wd, c)


# --------------------------------------------------------------------------
# JAX glue: im2col, Focus interleaving, module forwards (block-level jit)
# --------------------------------------------------------------------------

def _im2col(x, k, s, p):
    n, h, w, c = x.shape
    xp = jnp.pad(x, ((0, 0), (p, p), (p, p), (0, 0)))
    ho = (h + 2 * p - k) // s + 1
    wo = (w + 2 * p - k) // s + 1
    cols = []
    for dy in range(k):
        for dx in range(k):
            cols.append(xp[:, dy:dy + (ho - 1) * s + 1:s,
                           dx:dx + (wo - 1) * s + 1:s, :])
    a = jnp.concatenate(cols, axis=-1).reshape(n * ho * wo, k * k * c)
    return a, ho, wo


@functools.partial(jax.jit, static_argnames=("stride",))
def conv_fwd(p, x, stride=1):
    """ultralytics Conv: conv(no bias) + BN(eval, scale folded into w) + SiLU."""
    w4 = p["w"]                            # (k, k, cin, cout) bf16, scale folded
    k, _, cin, cout = w4.shape
    pad = k // 2                           # autopad (all kernels here are odd)
    n, h, wd, _ = x.shape
    if k == 1 and stride == 1:
        a, ho, wo = x.reshape(n * h * wd, cin), h, wd
    else:
        # TODO(synk): build the 3x3 taps inside the Pallas kernel from a haloed
        # NHWC block instead of materializing the im2col matrix in HBM.
        a, ho, wo = _im2col(x, k, stride, pad)
    out = matmul_bias_silu(a, w4.reshape(k * k * cin, cout), p["bias"])
    return out.reshape(n, ho, wo, cout)


def bottleneck_fwd(p, x, add):
    y = conv_fwd(p["cv2"], conv_fwd(p["cv1"], x))
    return x + y if add else y


@functools.partial(jax.jit, static_argnames=("shortcut",))
def c2f_fwd(p, x, shortcut=False):
    y = conv_fwd(p["cv1"], x)
    c = p["cv1"]["w"].shape[-1] // 2
    ys = [y[..., :c], y[..., c:]]
    for m in p["m"]:
        # Bottleneck(c, c, shortcut, e=1.0): c1 == c2 here, so add == shortcut.
        ys.append(bottleneck_fwd(m, ys[-1], add=shortcut))
    return conv_fwd(p["cv2"], jnp.concatenate(ys, axis=-1))


def _ilv_rows(even, odd):
    b, h2, w, c = even.shape
    return jnp.stack([even, odd], axis=2).reshape(b, 2 * h2, w, c)


def _ilv_cols(even, odd):
    b, h, w2, c = even.shape
    return jnp.stack([even, odd], axis=3).reshape(b, h, 2 * w2, c)


def focus_h_fwd(p, x):
    ee, eo = x[:, 0::2, 0::2, :], x[:, 0::2, 1::2, :]
    oe, oo = x[:, 1::2, 0::2, :], x[:, 1::2, 1::2, :]
    x1 = _ilv_rows(ee, oo)          # (b, h, w/2, c)
    x2 = _ilv_rows(eo, oe)
    y1 = conv_fwd(p["conv1"], x1)
    y2 = conv_fwd(p["conv2"], x2)
    y1e, y1o = y1[:, 0::2], y1[:, 1::2]
    y2e, y2o = y2[:, 0::2], y2[:, 1::2]
    row_even = _ilv_cols(y1e, y2e)  # result[::2, ::2]=y1e, result[::2, 1::2]=y2e
    row_odd = _ilv_cols(y2o, y1o)   # result[1::2, ::2]=y2o, result[1::2, 1::2]=y1o
    return _ilv_rows(row_even, row_odd)


def focus_v_fwd(p, x):
    ee, eo = x[:, 0::2, 0::2, :], x[:, 0::2, 1::2, :]
    oe, oo = x[:, 1::2, 0::2, :], x[:, 1::2, 1::2, :]
    x1 = _ilv_cols(ee, oo)          # (b, h/2, w, c)
    x2 = _ilv_cols(oe, eo)
    y1 = conv_fwd(p["conv1"], x1)
    y2 = conv_fwd(p["conv2"], x2)
    y1e, y1o = y1[:, :, 0::2], y1[:, :, 1::2]
    y2e, y2o = y2[:, :, 0::2], y2[:, :, 1::2]
    row_even = _ilv_cols(y1e, y2o)  # result[::2, ::2]=y1e, result[::2, 1::2]=y2o
    row_odd = _ilv_cols(y2e, y1o)   # result[1::2, ::2]=y2e, result[1::2, 1::2]=y1o
    return _ilv_rows(row_even, row_odd)


def bifocus_fwd(p, x):
    cat = jnp.concatenate(
        [x, focus_h_fwd(p["focus_h"], x), focus_v_fwd(p["focus_v"], x)], axis=-1)
    d = depthwise3x3_bias_silu(cat, p["dw_w"], p["dw_bias"])
    return conv_fwd(p["point"], d)


@jax.jit
def c2f_bifocus_fwd(p, x):
    return bifocus_fwd(p["bifocus"], c2f_fwd(p["c2f"], x, shortcut=True))


# --------------------------------------------------------------------------
# Deterministic parameter construction (synthetic weights, BN scale folded)
# --------------------------------------------------------------------------

class KeyGen:
    def __init__(self, seed):
        self._key = jax.random.PRNGKey(seed)
        self._i = 0

    def __call__(self):
        self._i += 1
        return jax.random.fold_in(self._key, self._i)


def _make_bn(kg, c):
    gamma = 1.0 + 0.1 * jax.random.normal(kg(), (c,), jnp.float32)
    beta = 0.1 * jax.random.normal(kg(), (c,), jnp.float32)
    scale = gamma / jnp.sqrt(1.0 + BN_EPS)  # running_mean=0, running_var=1 (eval)
    return scale.reshape(1, c), beta.reshape(1, c)


def make_conv(kg, cin, cout, k=1):
    fan = cin * k * k
    w = jax.random.normal(kg(), (k, k, cin, cout), jnp.float32) * (2.0 / fan) ** 0.5
    scale, bias = _make_bn(kg, cout)
    w_folded = (w * scale.reshape(1, 1, 1, cout)).astype(jnp.bfloat16)
    return {"w": w_folded, "bias": bias}


def make_bottleneck(kg, c1, c2, e=1.0):
    c_ = int(c2 * e)
    return {"cv1": make_conv(kg, c1, c_, 3), "cv2": make_conv(kg, c_, c2, 3)}


def make_c2f(kg, c1, c2, n=1, e=0.5):
    c = int(c2 * e)
    return {"cv1": make_conv(kg, c1, 2 * c, 1),
            "cv2": make_conv(kg, (2 + n) * c, c2, 1),
            "m": [make_bottleneck(kg, c, c) for _ in range(n)]}


def make_bifocus(kg, c1, c2):
    dw_scale, dw_bias = _make_bn(kg, 3 * c1)
    dw_w = jax.random.normal(kg(), (9, 3 * c1), jnp.float32) * (2.0 / 9.0) ** 0.5
    return {
        "focus_h": {"conv1": make_conv(kg, c1, c1, 3), "conv2": make_conv(kg, c1, c1, 3)},
        "focus_v": {"conv1": make_conv(kg, c1, c1, 3), "conv2": make_conv(kg, c1, c1, 3)},
        "dw_w": dw_w * dw_scale,      # BN scale folded into depthwise taps
        "dw_bias": dw_bias,
        "point": make_conv(kg, 3 * c1, c2, 1),
    }


def make_c2f_bifocus(kg, c1, c2, n=1):
    return {"c2f": make_c2f(kg, c1, c2, n=n),
            "bifocus": make_bifocus(kg, c2, c2)}


def make_backbone(seed=42):
    kg = KeyGen(seed)
    return {
        "stem0": make_conv(kg, 3, 64, 3),
        "stem1": make_conv(kg, 64, 128, 3),
        "stage1": [make_c2f_bifocus(kg, 128, 128) for _ in range(3)],
        "down2": make_conv(kg, 128, 256, 3),
        "stage2": [make_c2f(kg, 256, 256) for _ in range(6)],
        "down3": make_conv(kg, 256, 512, 3),
        "stage3": [make_c2f(kg, 512, 512) for _ in range(6)],
        "down4": make_conv(kg, 512, 1024, 3),
        "stage4": [make_c2f(kg, 1024, 1024) for _ in range(3)],
    }


def backbone_fwd(params, x_nchw):
    x = jnp.transpose(x_nchw, (0, 2, 3, 1)).astype(jnp.bfloat16)  # NCHW -> NHWC bf16
    x = conv_fwd(params["stem0"], x, stride=2)        # layer 0
    x = conv_fwd(params["stem1"], x, stride=2)        # layer 1
    for p in params["stage1"]:                        # layers 2-4 (C2f_BiFocus)
        x = c2f_bifocus_fwd(p, x)
    x = conv_fwd(params["down2"], x, stride=2)        # layer 5
    for p in params["stage2"]:                        # layers 6-11 (C2f)
        x = c2f_fwd(p, x, shortcut=False)
    out1 = x                                          # idx 11
    x = conv_fwd(params["down3"], x, stride=2)        # layer 12
    for p in params["stage3"]:                        # layers 13-18 (C2f)
        x = c2f_fwd(p, x, shortcut=False)
    out2 = x                                          # idx 18
    x = conv_fwd(params["down4"], x, stride=2)        # layer 19
    for p in params["stage4"]:                        # layers 20-22 (C2f)
        x = c2f_fwd(p, x, shortcut=False)
    out3 = x                                          # idx 22
    to_nchw = lambda t: jnp.transpose(t, (0, 3, 1, 2)).astype(jnp.float32)
    return [to_nchw(out1), to_nchw(out2), to_nchw(out3)]


if __name__ == "__main__":
    params = make_backbone(seed=42)
    x = jax.random.normal(jax.random.PRNGKey(0), (1, 3, 32, 32), jnp.float32)  # NCHW
    outs = backbone_fwd(params, x)
    outs = [jax.block_until_ready(o) for o in outs]
    expected = [(1, 256, 4, 4), (1, 512, 2, 2), (1, 1024, 1, 1)]
    got = [tuple(o.shape) for o in outs]
    assert got == expected, (got, expected)
    assert all(bool(jnp.isfinite(o).all()) for o in outs)
    print("KERNEL_OK")
</pallas_src>

<mosaic_0001>
module attributes {stable_mosaic.version = 11 : i64} {
  func.func @_matmul_bias_silu_kernel(%arg0: i32, %arg1: i32, %arg2: i32, %arg3: memref<256x128xbf16, #tpu.memory_space<vmem>>, %arg4: memref<128x128xbf16, #tpu.memory_space<vmem>>, %arg5: memref<1x128xf32, #tpu.memory_space<vmem>>, %arg6: memref<256x128xbf16, #tpu.memory_space<vmem>>, %arg7: memref<256x128xf32, #tpu.memory_space<vmem>>) attributes {dimension_semantics = [#tpu.dimension_semantics<parallel>, #tpu.dimension_semantics<parallel>, #tpu.dimension_semantics<arbitrary>], iteration_bounds = array<i64: 1, 1, 1>, scalar_prefetch = 0 : i64, scratch_operands = 1 : i64, tpu.core_type = #tpu.core_type<tc>, window_params = [{transform_indices = @transform_0, window_bounds = array<i64: 256, 128>}, {transform_indices = @transform_1, window_bounds = array<i64: 128, 128>}, {transform_indices = @transform_2, window_bounds = array<i64: 1, 128>}, {transform_indices = @transform_3, window_bounds = array<i64: 256, 128>}]} {
    %c0_i32 = arith.constant 0 : i32
    %0 = arith.cmpi eq, %arg2, %c0_i32 : i32
    %1 = arith.extui %0 : i1 to i32
    %c0_i32_0 = arith.constant 0 : i32
    %2 = arith.cmpi ne, %1, %c0_i32_0 : i32
    scf.if %2 {
      %cst_10 = arith.constant 0.000000e+00 : f32
      %12 = vector.broadcast %cst_10 : f32 to vector<256x128xf32>
      %c0_11 = arith.constant 0 : index
      %c0_12 = arith.constant 0 : index
      %13 = vector.load %arg7[%c0_11, %c0_12] : memref<256x128xf32, #tpu.memory_space<vmem>>, vector<256x128xf32>
      tpu.vector_store %arg7[%c0_11, %c0_12], %12 {strides = array<i32>} : memref<256x128xf32, #tpu.memory_space<vmem>>, vector<256x128xf32>,
    } else {
    }
    %c0 = arith.constant 0 : index
    %c0_1 = arith.constant 0 : index
    %3 = vector.load %arg7[%c0, %c0_1] : memref<256x128xf32, #tpu.memory_space<vmem>>, vector<256x128xf32>
    %c0_2 = arith.constant 0 : index
    %c0_3 = arith.constant 0 : index
    %4 = vector.load %arg3[%c0_2, %c0_3] : memref<256x128xbf16, #tpu.memory_space<vmem>>, vector<256x128xbf16>
    %c0_4 = arith.constant 0 : index
    %c0_5 = arith.constant 0 : index
    %5 = vector.load %arg4[%c0_4, %c0_5] : memref<128x128xbf16, #tpu.memory_space<vmem>>, vector<128x128xbf16>
    %cst = arith.constant dense<0.000000e+00> : vector<256x128xf32>
    %6 = tpu.matmul %4, %5, %cst {dimension_numbers = #tpu.dot_dimension_numbers<[1], [0], [0], [1], [0, 0, 1, 1], [], []>} : vector<256x128xbf16>, vector<128x128xbf16>, vector<256x128xf32> -> vector<256x128xf32>
    %7 = arith.addf %3, %6 : vector<256x128xf32>
    %c0_6 = arith.constant 0 : index
    %c0_7 = arith.constant 0 : index
    %8 = vector.load %arg7[%c0_6, %c0_7] : memref<256x128xf32, #tpu.memory_space<vmem>>, vector<256x128xf32>
    tpu.vector_store %arg7[%c0_6, %c0_7], %7 {strides = array<i32>} : memref<256x128xf32, #tpu.memory_space<vmem>>, vector<256x128xf32>,
    %c0_i32_8 = arith.constant 0 : i32
    %9 = arith.cmpi eq, %arg2, %c0_i32_8 : i32
    %10 = arith.extui %9 : i1 to i32
    %c0_i32_9 = arith.constant 0 : i32
    %11 = arith.cmpi ne, %10, %c0_i32_9 : i32
    scf.if %11 {
      %c0_10 = arith.constant 0 : index
      %c0_11 = arith.constant 0 : index
      %12 = vector.load %arg7[%c0_10, %c0_11] : memref<256x128xf32, #tpu.memory_space<vmem>>, vector<256x128xf32>
      %c0_12 = arith.constant 0 : index
      %c0_13 = arith.constant 0 : index
      %13 = vector.load %arg5[%c0_12, %c0_13] : memref<1x128xf32, #tpu.memory_space<vmem>>, vector<1x128xf32>
      %14 = vector.broadcast %13 : vector<1x128xf32> to vector<256x128xf32>
      %15 = arith.addf %12, %14 : vector<256x128xf32>
      %cst_14 = arith.constant 0.000000e+00 : f32
      %16 = vector.broadcast %cst_14 : f32 to vector<256x128xf32>
      %17 = arith.subf %16, %15 : vector<256x128xf32>
      %18 = math.exp %17 : vector<256x128xf32>
      %cst_15 = arith.constant 1.000000e+00 : f32
      %19 = vector.broadcast %cst_15 : f32 to vector<256x128xf32>
      %20 = arith.addf %19, %18 : vector<256x128xf32>
      %21 = tpu.reciprocal %20 {approx = true} : vector<256x128xf32> -> vector<256x128xf32>
      %22 = arith.mulf %15, %21 : vector<256x128xf32>
      %23 = arith.truncf %22 : vector<256x128xf32> to vector<256x128xbf16>
      %c0_16 = arith.constant 0 : index
      %c0_17 = arith.constant 0 : index
      %24 = vector.load %arg6[%c0_16, %c0_17] : memref<256x128xbf16, #tpu.memory_space<vmem>>, vector<256x128xbf16>
      tpu.vector_store %arg6[%c0_16, %c0_17], %23 {strides = array<i32>} : memref<256x128xbf16, #tpu.memory_space<vmem>>, vector<256x128xbf16>,
    } else {
    }
    return
  }
  func.func @transform_0(%arg0: i32, %arg1: i32, %arg2: i32) -> (i32, i32) {
    %c0_i32 = arith.constant 0 : i32
    return %arg0, %arg2 : i32, i32
  }
  func.func @transform_1(%arg0: i32, %arg1: i32, %arg2: i32) -> (i32, i32) {
    %c0_i32 = arith.constant 0 : i32
    return %arg2, %arg1 : i32, i32
  }
  func.func @transform_2(%arg0: i32, %arg1: i32, %arg2: i32) -> (i32, i32) {
    %c0_i32 = arith.constant 0 : i32
    %c0_i32_0 = arith.constant 0 : i32
    return %c0_i32, %arg1 : i32, i32
  }
  func.func @transform_3(%arg0: i32, %arg1: i32, %arg2: i32) -> (i32, i32) {
    %c0_i32 = arith.constant 0 : i32
    return %arg0, %arg1 : i32, i32
  }
}

</mosaic_0001>

<llo_original>
// kernel: conv_fwd.1
$region0: #{conv_fwd.1}
  #allocation0 [shape = 'u32[]', space=smem, size = 0x4, offset = 0x4, fixed_abs, tag = 'smem constant byte address 0x4 - core index']
  #allocation1 [shape = 'u32[144,128]{1,0:T(1,128)}', space=vmem, size = 0x12000, scoped, tag = 'internal scratch']
  #allocation2 [shape = 'f32[256,128]{1,0:T(8,128)}', space=vmem, size = 0x20000, scoped, tag = 'scratch operand']
  %s0 = inlined_call_operand.vmem [shape: bf16[256,128], index: 0, kind: input, shape index: {}]
  %s1 = inlined_call_operand.vmem [shape: bf16[128,128], index: 1, kind: input, shape index: {}]
  %s2 = inlined_call_operand.vmem [shape: f32[1,128], index: 2, kind: input, shape index: {}]
  %s3 = inlined_call_operand.hbm [shape: bf16[256,128], index: 3, kind: output, shape index: {}]
  %s4 = sld [smem:[#allocation0]]
  $region30: #{conv_fwd.1} parent=0
    _
  %s6 = ssub.s32 1, %s4
  %s7 = scalar_select 0, %s6, %s4
  $region1: #{conv_fwd.1} parent=0
    #allocation3 [shape = 'u8[65536]{0}', space=vmem, size = 0x10000, scoped, tag = 'output window, operand 0, single buffered']
    #allocation4 [shape = 's32[1]{0}', space=sflag, size = 0x4, scoped, tag = 'scoped memory for conv_fwd.1']
    %8 = vsyncpa [#allocation4], 0
    // Predicated region
    $region2: #{conv_fwd.1} parent=1 // pred_check
      _
    $region3: #{conv_fwd.1} parent=1 // pred_check_branch
      %10 = sbr.rel (0) target = $region5
    $region4: #{conv_fwd.1} parent=1 // pred_region
      _
    $region5: #{conv_fwd.1} parent=1 // pred_fallthru
      _
    // Predicated region
    $region6: #{conv_fwd.1} parent=1 // pred_check
      _
    $region7: #{conv_fwd.1} parent=1 // pred_check_branch
      %12 = sbr.rel (0) target = $region9
    $region8: #{conv_fwd.1} parent=1 // pred_region
      _
    $region9: #{conv_fwd.1} parent=1 // pred_fallthru
      _
    // Predicated region
    $region10: #{conv_fwd.1} parent=1 // pred_check
      _
    $region11: #{conv_fwd.1} parent=1 // pred_check_branch
      %14 = sbr.rel (0) target = $region13
    $region12: #{conv_fwd.1} parent=1 // pred_region
      _
    $region13: #{conv_fwd.1} parent=1 // pred_fallthru
      _
    %p16 = scmp.eq.s32.totalorder 0, 0
    // Predicated region
    $region14: #{conv_fwd.1} parent=1 // pred_check
      %p17 = pneg %p16
    $region15: #{conv_fwd.1} parent=1 // pred_check_branch
      %19 = sbr.rel (%p17) target = $region17
    $region16: #{conv_fwd.1} parent=1 // pred_region
      %20 = vst [vmem:[#allocation2] sm:$0xff] 0.0
      %21 = vst [vmem:[#allocation2 + $0x8] sm:$0xff] 0.0
      %22 = vst [vmem:[#allocation2 + $0x10] sm:$0xff] 0.0
      %23 = vst [vmem:[#allocation2 + $0x18] sm:$0xff] 0.0
      %24 = vst [vmem:[#allocation2 + $0x20] sm:$0xff] 0.0
      %25 = vst [vmem:[#allocation2 + $0x28] sm:$0xff] 0.0
      %26 = vst [vmem:[#allocation2 + $0x30] sm:$0xff] 0.0
      %27 = vst [vmem:[#allocation2 + $0x38] sm:$0xff] 0.0
      %28 = vst [vmem:[#allocation2 + $0x40] sm:$0xff] 0.0
      %29 = vst [vmem:[#allocation2 + $0x48] sm:$0xff] 0.0
      %30 = vst [vmem:[#allocation2 + $0x50] sm:$0xff] 0.0
      %31 = vst [vmem:[#allocation2 + $0x58] sm:$0xff] 0.0
      %32 = vst [vmem:[#allocation2 + $0x60] sm:$0xff] 0.0
      %33 = vst [vmem:[#allocation2 + $0x68] sm:$0xff] 0.0
      %34 = vst [vmem:[#allocation2 + $0x70] sm:$0xff] 0.0
      %35 = vst [vmem:[#allocation2 + $0x78] sm:$0xff] 0.0
      %36 = vst [vmem:[#allocation2 + $0x80] sm:$0xff] 0.0
      %37 = vst [vmem:[#allocation2 + $0x88] sm:$0xff] 0.0
      %38 = vst [vmem:[#allocation2 + $0x90] sm:$0xff] 0.0
      %39 = vst [vmem:[#allocation2 + $0x98] sm:$0xff] 0.0
      %40 = vst [vmem:[#allocation2 + $0xa0] sm:$0xff] 0.0
      %41 = vst [vmem:[#allocation2 + $0xa8] sm:$0xff] 0.0
      %42 = vst [vmem:[#allocation2 + $0xb0] sm:$0xff] 0.0
      %43 = vst [vmem:[#allocation2 + $0xb8] sm:$0xff] 0.0
      %44 = vst [vmem:[#allocation2 + $0xc0] sm:$0xff] 0.0
      %45 = vst [vmem:[#allocation2 + $0xc8] sm:$0xff] 0.0
      %46 = vst [vmem:[#allocation2 + $0xd0] sm:$0xff] 0.0
      %47 = vst [vmem:[#allocation2 + $0xd8] sm:$0xff] 0.0
      %48 = vst [vmem:[#allocation2 + $0xe0] sm:$0xff] 0.0
      %49 = vst [vmem:[#allocation2 + $0xe8] sm:$0xff] 0.0
      %50 = vst [vmem:[#allocation2 + $0xf0] sm:$0xff] 0.0
      %51 = vst [vmem:[#allocation2 + $0xf8] sm:$0xff] 0.0
    $region17: #{conv_fwd.1} parent=1 // pred_fallthru
      _
    %v52 = vld [vmem:[#allocation2] sm:$0xff]
    %v53 = vld [vmem:[#allocation2 + $0x8] sm:$0xff]
    %v54 = vld [vmem:[#allocation2 + $0x10] sm:$0xff]
    %v55 = vld [vmem:[#allocation2 + $0x18] sm:$0xff]
    %v56 = vld [vmem:[#allocation2 + $0x20] sm:$0xff]
    %v57 = vld [vmem:[#allocation2 + $0x28] sm:$0xff]
    %v58 = vld [vmem:[#allocation2 + $0x30] sm:$0xff]
    %v59 = vld [vmem:[#allocation2 + $0x38] sm:$0xff]
    %v60 = vld [vmem:[#allocation2 + $0x40] sm:$0xff]
    %v61 = vld [vmem:[#allocation2 + $0x48] sm:$0xff]
    %v62 = vld [vmem:[#allocation2 + $0x50] sm:$0xff]
    %v63 = vld [vmem:[#allocation2 + $0x58] sm:$0xff]
    %v64 = vld [vmem:[#allocation2 + $0x60] sm:$0xff]
    %v65 = vld [vmem:[#allocation2 + $0x68] sm:$0xff]
    %v66 = vld [vmem:[#allocation2 + $0x70] sm:$0xff]
    %v67 = vld [vmem:[#allocation2 + $0x78] sm:$0xff]
    %v68 = vld [vmem:[#allocation2 + $0x80] sm:$0xff]
    %v69 = vld [vmem:[#allocation2 + $0x88] sm:$0xff]
    %v70 = vld [vmem:[#allocation2 + $0x90] sm:$0xff]
    %v71 = vld [vmem:[#allocation2 + $0x98] sm:$0xff]
    %v72 = vld [vmem:[#allocation2 + $0xa0] sm:$0xff]
    %v73 = vld [vmem:[#allocation2 + $0xa8] sm:$0xff]
    %v74 = vld [vmem:[#allocation2 + $0xb0] sm:$0xff]
    %v75 = vld [vmem:[#allocation2 + $0xb8] sm:$0xff]
    %v76 = vld [vmem:[#allocation2 + $0xc0] sm:$0xff]
    %v77 = vld [vmem:[#allocation2 + $0xc8] sm:$0xff]
    %v78 = vld [vmem:[#allocation2 + $0xd0] sm:$0xff]
    %v79 = vld [vmem:[#allocation2 + $0xd8] sm:$0xff]
    %v80 = vld [vmem:[#allocation2 + $0xe0] sm:$0xff]
    %v81 = vld [vmem:[#allocation2 + $0xe8] sm:$0xff]
    %v82 = vld [vmem:[#allocation2 + $0xf0] sm:$0xff]
    %v83 = vld [vmem:[#allocation2 + $0xf8] sm:$0xff]
    %v84 = vld [vmem:[%s0] sm:$0xf]
    %v85 = vld [vmem:[%s0 + $0x4] sm:$0xf]
    %v86 = vld [vmem:[%s0 + $0x8] sm:$0xf]
    %v87 = vld [vmem:[%s0 + $0xc] sm:$0xf]
    %v88 = vld [vmem:[%s0 + $0x10] sm:$0xf]
    %v89 = vld [vmem:[%s0 + $0x14] sm:$0xf]
    %v90 = vld [vmem:[%s0 + $0x18] sm:$0xf]
    %v91 = vld [vmem:[%s0 + $0x1c] sm:$0xf]
    %v92 = vld [vmem:[%s0 + $0x20] sm:$0xf]
    %v93 = vld [vmem:[%s0 + $0x24] sm:$0xf]
    %v94 = vld [vmem:[%s0 + $0x28] sm:$0xf]
    %v95 = vld [vmem:[%s0 + $0x2c] sm:$0xf]
    %v96 = vld [vmem:[%s0 + $0x30] sm:$0xf]
    %v97 = vld [vmem:[%s0 + $0x34] sm:$0xf]
    %v98 = vld [vmem:[%s0 + $0x38] sm:$0xf]
    %v99 = vld [vmem:[%s0 + $0x3c] sm:$0xf]
    %v100 = vld [vmem:[%s0 + $0x40] sm:$0xf]
    %v101 = vld [vmem:[%s0 + $0x44] sm:$0xf]
    %v102 = vld [vmem:[%s0 + $0x48] sm:$0xf]
    %v103 = vld [vmem:[%s0 + $0x4c] sm:$0xf]
    %v104 = vld [vmem:[%s0 + $0x50] sm:$0xf]
    %v105 = vld [vmem:[%s0 + $0x54] sm:$0xf]
    %v106 = vld [vmem:[%s0 + $0x58] sm:$0xf]
    %v107 = vld [vmem:[%s0 + $0x5c] sm:$0xf]
    %v108 = vld [vmem:[%s0 + $0x60] sm:$0xf]
    %v109 = vld [vmem:[%s0 + $0x64] sm:$0xf]
    %v110 = vld [vmem:[%s0 + $0x68] sm:$0xf]
    %v111 = vld [vmem:[%s0 + $0x6c] sm:$0xf]
    %v112 = vld [vmem:[%s0 + $0x70] sm:$0xf]
    %v113 = vld [vmem:[%s0 + $0x74] sm:$0xf]
    %v114 = vld [vmem:[%s0 + $0x78] sm:$0xf]
    %v115 = vld [vmem:[%s0 + $0x7c] sm:$0xf]
    %v116 = vld [vmem:[%s1] sm:$0xf]
    %v117 = vld [vmem:[%s1 + $0x4] sm:$0xf]
    %v118 = vld [vmem:[%s1 + $0x8] sm:$0xf]
    %v119 = vld [vmem:[%s1 + $0xc] sm:$0xf]
    %v120 = vld [vmem:[%s1 + $0x10] sm:$0xf]
    %v121 = vld [vmem:[%s1 + $0x14] sm:$0xf]
    %v122 = vld [vmem:[%s1 + $0x18] sm:$0xf]
    %v123 = vld [vmem:[%s1 + $0x1c] sm:$0xf]
    %v124 = vld [vmem:[%s1 + $0x20] sm:$0xf]
    %v125 = vld [vmem:[%s1 + $0x24] sm:$0xf]
    %v126 = vld [vmem:[%s1 + $0x28] sm:$0xf]
    %v127 = vld [vmem:[%s1 + $0x2c] sm:$0xf]
    %v128 = vld [vmem:[%s1 + $0x30] sm:$0xf]
    %v129 = vld [vmem:[%s1 + $0x34] sm:$0xf]
    %v130 = vld [vmem:[%s1 + $0x38] sm:$0xf]
    %v131 = vld [vmem:[%s1 + $0x3c] sm:$0xf]
    %v164 = vunpack.c.l.b16 %v84
    %v165 = vunpack.c.l.b16 %v85
    %v166 = vunpack.c.l.b16 %v86
    %v167 = vunpack.c.l.b16 %v87
    %v168 = vunpack.c.l.b16 %v88
    %v169 = vunpack.c.l.b16 %v89
    %v170 = vunpack.c.l.b16 %v90
    %v171 = vunpack.c.l.b16 %v91
    %v172 = vunpack.c.l.b16 %v92
    %v173 = vunpack.c.l.b16 %v93
    %v174 = vunpack.c.l.b16 %v94
    %v175 = vunpack.c.l.b16 %v95
    %v176 = vunpack.c.l.b16 %v96
    %v177 = vunpack.c.l.b16 %v97
    %v178 = vunpack.c.l.b16 %v98
    %v179 = vunpack.c.l.b16 %v99
    %v180 = vunpack.c.l.b16 %v100
    %v181 = vunpack.c.l.b16 %v101
    %v182 = vunpack.c.l.b16 %v102
    %v183 = vunpack.c.l.b16 %v103
    %v184 = vunpack.c.l.b16 %v104
    %v185 = vunpack.c.l.b16 %v105
    %v186 = vunpack.c.l.b16 %v106
    %v187 = vunpack.c.l.b16 %v107
    %v188 = vunpack.c.l.b16 %v108
    %v189 = vunpack.c.l.b16 %v109
    %v190 = vunpack.c.l.b16 %v110
    %v191 = vunpack.c.l.b16 %v111
    %v192 = vunpack.c.l.b16 %v112
    %v193 = vunpack.c.l.b16 %v113
    %v194 = vunpack.c.l.b16 %v114
    %v195 = vunpack.c.l.b16 %v115
    %v196 = vpack.c.b16 %v165, %v164
    %v197 = vpack.c.b16 %v167, %v166
    %v198 = vpack.c.b16 %v169, %v168
    %v199 = vpack.c.b16 %v171, %v170
    %v200 = vpack.c.b16 %v173, %v172
    %v201 = vpack.c.b16 %v175, %v174
    %v202 = vpack.c.b16 %v177, %v176
    %v203 = vpack.c.b16 %v179, %v178
    %v204 = vpack.c.b16 %v181, %v180
    %v205 = vpack.c.b16 %v183, %v182
    %v206 = vpack.c.b16 %v185, %v184
    %v207 = vpack.c.b16 %v187, %v186
    %v208 = vpack.c.b16 %v189, %v188
    %v209 = vpack.c.b16 %v191, %v190
    %v210 = vpack.c.b16 %v193, %v192
    %v211 = vpack.c.b16 %v195, %v194
    %v244 = vunpack.c.l.b16 %v116
    %v245 = vunpack.c.l.b16 %v117
    %v246 = vunpack.c.l.b16 %v118
    %v247 = vunpack.c.l.b16 %v119
    %v248 = vunpack.c.l.b16 %v120
    %v249 = vunpack.c.l.b16 %v121
    %v250 = vunpack.c.l.b16 %v122
    %v251 = vunpack.c.l.b16 %v123
    %v252 = vunpack.c.l.b16 %v124
    %v253 = vunpack.c.l.b16 %v125
    %v254 = vunpack.c.l.b16 %v126
    %v255 = vunpack.c.l.b16 %v127
    %v256 = vunpack.c.l.b16 %v128
    %v257 = vunpack.c.l.b16 %v129
    %v258 = vunpack.c.l.b16 %v130
    %v259 = vunpack.c.l.b16 %v131
    %v260 = vpack.c.b16 %v245, %v244
    %v261 = vpack.c.b16 %v247, %v246
    %v262 = vpack.c.b16 %v249, %v248
    %v263 = vpack.c.b16 %v251, %v250
    %v264 = vpack.c.b16 %v253, %v252
    %v265 = vpack.c.b16 %v255, %v254
    %v266 = vpack.c.b16 %v257, %v256
    %v267 = vpack.c.b16 %v259, %v258
    %276 = vmatprep.subr.bf16.mxu0 0
    %277 = vmatpush1.bf16.msra.mxu0 %v267
    %278 = vmatprep.subr.bf16.mxu0 0
    %279 = vmatpush1.bf16.msra.mxu0 %v266
    %280 = vmatprep.subr.bf16.mxu0 0
    %281 = vmatpush1.bf16.msra.mxu0 %v265
    %282 = vmatprep.subr.bf16.mxu0 0
    %283 = vmatpush1.bf16.msra.mxu0 %v264
    %284 = vmatprep.subr.bf16.mxu0 0
    %285 = vmatpush1.bf16.msra.mxu0 %v263
    %286 = vmatprep.subr.bf16.mxu0 0
    %287 = vmatpush1.bf16.msra.mxu0 %v262
    %288 = vmatprep.subr.bf16.mxu0 0
    %289 = vmatpush1.bf16.msra.mxu0 %v261
    %290 = vmatprep.subr.bf16.mxu0 0
    %291 = vmatpush1.bf16.msra.mxu0 %v260
    %292 = vmatprep.subr.bf16.mxu0 0
    %293 = vmatpush2.bf16.msra.mxu0 0
    %294 = vmatprep.subr.bf16.mxu0 0
    %295 = vmatpush2.bf16.msra.mxu0 0
    %296 = vmatprep.subr.bf16.mxu0 0
    %297 = vmatpush2.bf16.msra.mxu0 0
    %298 = vmatprep.subr.bf16.mxu0 0
    %299 = vmatpush2.bf16.msra.mxu0 0
    %300 = vmatprep.subr.bf16.mxu0 0
    %301 = vmatpush2.bf16.msra.mxu0 0
    %302 = vmatprep.subr.bf16.mxu0 0
    %303 = vmatpush2.bf16.msra.mxu0 0
    %304 = vmatprep.subr.bf16.mxu0 0
    %305 = vmatpush2.bf16.msra.mxu0 0
    %306 = vmatprep.subr.bf16.mxu0 0
    %307 = vmatpush2.bf16.msra.mxu0 0
    %308 = vmatprep.mubr.bf16.mxu0 0
    %309 = vmatmul.mubr.bf16.gmra.mxu0 %v196
    %v310 = vpop.f32.mrf.mxu0
    %v311 = vadd.f32 0.0, %v310
    %v312 = vpop.f32.mrf.mxu0
    %v313 = vpop.f32.mrf.mxu0
    %v314 = vadd.f32 0.0, %v313
    %v315 = vpop.f32.mrf.mxu0
    %316 = vmatprep.mubr.bf16.mxu0 0
    %317 = vmatmul.mubr.bf16.gmra.mxu0 %v197
    %v318 = vpop.f32.mrf.mxu0
    %v319 = vadd.f32 0.0, %v318
    %v320 = vpop.f32.mrf.mxu0
    %v321 = vpop.f32.mrf.mxu0
    %v322 = vadd.f32 0.0, %v321
    %v323 = vpop.f32.mrf.mxu0
    %324 = vmatprep.mubr.bf16.mxu0 0
    %325 = vmatmul.mubr.bf16.gmra.mxu0 %v198
    %v326 = vpop.f32.mrf.mxu0
    %v327 = vadd.f32 0.0, %v326
    %v328 = vpop.f32.mrf.mxu0
    %v329 = vpop.f32.mrf.mxu0
    %v330 = vadd.f32 0.0, %v329
    %v331 = vpop.f32.mrf.mxu0
    %332 = vmatprep.mubr.bf16.mxu0 0
    %333 = vmatmul.mubr.bf16.gmra.mxu0 %v199
    %v334 = vpop.f32.mrf.mxu0
    %v335 = vadd.f32 0.0, %v334
    %v336 = vpop.f32.mrf.mxu0
    %v337 = vpop.f32.mrf.mxu0
    %v338 = vadd.f32 0.0, %v337
    %v339 = vpop.f32.mrf.mxu0
    %340 = vmatprep.mubr.bf16.mxu0 0
    %341 = vmatmul.mubr.bf16.gmra.mxu0 %v200
    %v342 = vpop.f32.mrf.mxu0
    %v343 = vadd.f32 0.0, %v342
    %v344 = vpop.f32.mrf.mxu0
    %v345 = vpop.f32.mrf.mxu0
    %v346 = vadd.f32 0.0, %v345
    %v347 = vpop.f32.mrf.mxu0
    %348 = vmatprep.mubr.bf16.mxu0 0
    %349 = vmatmul.mubr.bf16.gmra.mxu0 %v201
    %v350 = vpop.f32.mrf.mxu0
    %v351 = vadd.f32 0.0, %v350
    %v352 = vpop.f32.mrf.mxu0
    %v353 = vpop.f32.mrf.mxu0
    %v354 = vadd.f32 0.0, %v353
    %v355 = vpop.f32.mrf.mxu0
    %356 = vmatprep.mubr.bf16.mxu0 0
    %357 = vmatmul.mubr.bf16.gmra.mxu0 %v202
    %v358 = vpop.f32.mrf.mxu0
    %v359 = vadd.f32 0.0, %v358
    %v360 = vpop.f32.mrf.mxu0
    %v361 = vpop.f32.mrf.mxu0
    %v362 = vadd.f32 0.0, %v361
    %v363 = vpop.f32.mrf.mxu0
    %364 = vmatprep.mubr.bf16.mxu0 0
    %365 = vmatmul.mubr.bf16.gmra.mxu0 %v203
    %v366 = vpop.f32.mrf.mxu0
    %v367 = vadd.f32 0.0, %v366
    %v368 = vpop.f32.mrf.mxu0
    %v369 = vpop.f32.mrf.mxu0
    %v370 = vadd.f32 0.0, %v369
    %v371 = vpop.f32.mrf.mxu0
    %372 = vmatprep.mubr.bf16.mxu0 0
    %373 = vmatmul.mubr.bf16.gmra.mxu0 %v204
    %v374 = vpop.f32.mrf.mxu0
    %v375 = vadd.f32 0.0, %v374
    %v376 = vpop.f32.mrf.mxu0
    %v377 = vpop.f32.mrf.mxu0
    %v378 = vadd.f32 0.0, %v377
    %v379 = vpop.f32.mrf.mxu0
    %380 = vmatprep.mubr.bf16.mxu0 0
    %381 = vmatmul.mubr.bf16.gmra.mxu0 %v205
    %v382 = vpop.f32.mrf.mxu0
    %v383 = vadd.f32 0.0, %v382
    %v384 = vpop.f32.mrf.mxu0
    %v385 = vpop.f32.mrf.mxu0
    %v386 = vadd.f32 0.0, %v385
    %v387 = vpop.f32.mrf.mxu0
    %388 = vmatprep.mubr.bf16.mxu0 0
    %389 = vmatmul.mubr.bf16.gmra.mxu0 %v206
    %v390 = vpop.f32.mrf.mxu0
    %v391 = vadd.f32 0.0, %v390
    %v392 = vpop.f32.mrf.mxu0
    %v393 = vpop.f32.mrf.mxu0
    %v394 = vadd.f32 0.0, %v393
    %v395 = vpop.f32.mrf.mxu0
    %396 = vmatprep.mubr.bf16.mxu0 0
    %397 = vmatmul.mubr.bf16.gmra.mxu0 %v207
    %v398 = vpop.f32.mrf.mxu0
    %v399 = vadd.f32 0.0, %v398
    %v400 = vpop.f32.mrf.mxu0
    %v401 = vpop.f32.mrf.mxu0
    %v402 = vadd.f32 0.0, %v401
    %v403 = vpop.f32.mrf.mxu0
    %404 = vmatprep.mubr.bf16.mxu0 0
    %405 = vmatmul.mubr.bf16.gmra.mxu0 %v208
    %v406 = vpop.f32.mrf.mxu0
    %v407 = vadd.f32 0.0, %v406
    %v408 = vpop.f32.mrf.mxu0
    %v409 = vpop.f32.mrf.mxu0
    %v410 = vadd.f32 0.0, %v409
    %v411 = vpop.f32.mrf.mxu0
    %412 = vmatprep.mubr.bf16.mxu0 0
    %413 = vmatmul.mubr.bf16.gmra.mxu0 %v209
    %v414 = vpop.f32.mrf.mxu0
    %v415 = vadd.f32 0.0, %v414
    %v416 = vpop.f32.mrf.mxu0
    %v417 = vpop.f32.mrf.mxu0
    %v418 = vadd.f32 0.0, %v417
    %v419 = vpop.f32.mrf.mxu0
    %420 = vmatprep.mubr.bf16.mxu0 0
    %421 = vmatmul.mubr.bf16.gmra.mxu0 %v210
    %v422 = vpop.f32.mrf.mxu0
    %v423 = vadd.f32 0.0, %v422
    %v424 = vpop.f32.mrf.mxu0
    %v425 = vpop.f32.mrf.mxu0
    %v426 = vadd.f32 0.0, %v425
    %v427 = vpop.f32.mrf.mxu0
    %428 = vmatprep.mubr.bf16.mxu0 0
    %429 = vmatmul.mubr.bf16.gmra.mxu0 %v211
    %v430 = vpop.f32.mrf.mxu0
    %v431 = vadd.f32 0.0, %v430
    %v432 = vpop.f32.mrf.mxu0
    %v433 = vpop.f32.mrf.mxu0
    %v434 = vadd.f32 0.0, %v433
    %v435 = vpop.f32.mrf.mxu0
    %436 = vdwg.mxu0
    %v437 = vadd.f32 %v52, %v311
    %v438 = vadd.f32 %v53, %v314
    %v439 = vadd.f32 %v54, %v319
    %v440 = vadd.f32 %v55, %v322
    %v441 = vadd.f32 %v56, %v327
    %v442 = vadd.f32 %v57, %v330
    %v443 = vadd.f32 %v58, %v335
    %v444 = vadd.f32 %v59, %v338
    %v445 = vadd.f32 %v60, %v343
    %v446 = vadd.f32 %v61, %v346
    %v447 = vadd.f32 %v62, %v351
    %v448 = vadd.f32 %v63, %v354
    %v449 = vadd.f32 %v64, %v359
    %v450 = vadd.f32 %v65, %v362
    %v451 = vadd.f32 %v66, %v367
    %v452 = vadd.f32 %v67, %v370
    %v453 = vadd.f32 %v68, %v375
    %v454 = vadd.f32 %v69, %v378
    %v455 = vadd.f32 %v70, %v383
    %v456 = vadd.f32 %v71, %v386
    %v457 = vadd.f32 %v72, %v391
    %v458 = vadd.f32 %v73, %v394
    %v459 = vadd.f32 %v74, %v399
    %v460 = vadd.f32 %v75, %v402
    %v461 = vadd.f32 %v76, %v407
    %v462 = vadd.f32 %v77, %v410
    %v463 = vadd.f32 %v78, %v415
    %v464 = vadd.f32 %v79, %v418
    %v465 = vadd.f32 %v80, %v423
    %v466 = vadd.f32 %v81, %v426
    %v467 = vadd.f32 %v82, %v431
    %v468 = vadd.f32 %v83, %v434
    %469 = vst [vmem:[#allocation2] sm:$0xff] %v437
    %470 = vst [vmem:[#allocation2 + $0x8] sm:$0xff] %v438
    %471 = vst [vmem:[#allocation2 + $0x10] sm:$0xff] %v439
    %472 = vst [vmem:[#allocation2 + $0x18] sm:$0xff] %v440
    %473 = vst [vmem:[#allocation2 + $0x20] sm:$0xff] %v441
    %474 = vst [vmem:[#allocation2 + $0x28] sm:$0xff] %v442
    %475 = vst [vmem:[#allocation2 + $0x30] sm:$0xff] %v443
    %476 = vst [vmem:[#allocation2 + $0x38] sm:$0xff] %v444
    %477 = vst [vmem:[#allocation2 + $0x40] sm:$0xff] %v445
    %478 = vst [vmem:[#allocation2 + $0x48] sm:$0xff] %v446
    %479 = vst [vmem:[#allocation2 + $0x50] sm:$0xff] %v447
    %480 = vst [vmem:[#allocation2 + $0x58] sm:$0xff] %v448
    %481 = vst [vmem:[#allocation2 + $0x60] sm:$0xff] %v449
    %482 = vst [vmem:[#allocation2 + $0x68] sm:$0xff] %v450
    %483 = vst [vmem:[#allocation2 + $0x70] sm:$0xff] %v451
    %484 = vst [vmem:[#allocation2 + $0x78] sm:$0xff] %v452
    %485 = vst [vmem:[#allocation2 + $0x80] sm:$0xff] %v453
    %486 = vst [vmem:[#allocation2 + $0x88] sm:$0xff] %v454
    %487 = vst [vmem:[#allocation2 + $0x90] sm:$0xff] %v455
    %488 = vst [vmem:[#allocation2 + $0x98] sm:$0xff] %v456
    %489 = vst [vmem:[#allocation2 + $0xa0] sm:$0xff] %v457
    %490 = vst [vmem:[#allocation2 + $0xa8] sm:$0xff] %v458
    %491 = vst [vmem:[#allocation2 + $0xb0] sm:$0xff] %v459
    %492 = vst [vmem:[#allocation2 + $0xb8] sm:$0xff] %v460
    %493 = vst [vmem:[#allocation2 + $0xc0] sm:$0xff] %v461
    %494 = vst [vmem:[#allocation2 + $0xc8] sm:$0xff] %v462
    %495 = vst [vmem:[#allocation2 + $0xd0] sm:$0xff] %v463
    %496 = vst [vmem:[#allocation2 + $0xd8] sm:$0xff] %v464
    %497 = vst [vmem:[#allocation2 + $0xe0] sm:$0xff] %v465
    %498 = vst [vmem:[#allocation2 + $0xe8] sm:$0xff] %v466
    %499 = vst [vmem:[#allocation2 + $0xf0] sm:$0xff] %v467
    %500 = vst [vmem:[#allocation2 + $0xf8] sm:$0xff] %v468
    // Predicated region
    $region18: #{conv_fwd.1} parent=1 // pred_check
      %p501 = pneg %p16
    $region19: #{conv_fwd.1} parent=1 // pred_check_branch
      %503 = sbr.rel (%p501) target = $region21
    $region20: #{conv_fwd.1} parent=1 // pred_region
      %v504 = vld [vmem:[#allocation2] sm:$0xff]
      %v505 = vld [vmem:[#allocation2 + $0x8] sm:$0xff]
      %v506 = vld [vmem:[#allocation2 + $0x10] sm:$0xff]
      %v507 = vld [vmem:[#allocation2 + $0x18] sm:$0xff]
      %v508 = vld [vmem:[#allocation2 + $0x20] sm:$0xff]
      %v509 = vld [vmem:[#allocation2 + $0x28] sm:$0xff]
      %v510 = vld [vmem:[#allocation2 + $0x30] sm:$0xff]
      %v511 = vld [vmem:[#allocation2 + $0x38] sm:$0xff]
      %v512 = vld [vmem:[#allocation2 + $0x40] sm:$0xff]
      %v513 = vld [vmem:[#allocation2 + $0x48] sm:$0xff]
      %v514 = vld [vmem:[#allocation2 + $0x50] sm:$0xff]
      %v515 = vld [vmem:[#allocation2 + $0x58] sm:$0xff]
      %v516 = vld [vmem:[#allocation2 + $0x60] sm:$0xff]
      %v517 = vld [vmem:[#allocation2 + $0x68] sm:$0xff]
      %v518 = vld [vmem:[#allocation2 + $0x70] sm:$0xff]
      %v519 = vld [vmem:[#allocation2 + $0x78] sm:$0xff]
      %v520 = vld [vmem:[#allocation2 + $0x80] sm:$0xff]
      %v521 = vld [vmem:[#allocation2 + $0x88] sm:$0xff]
      %v522 = vld [vmem:[#allocation2 + $0x90] sm:$0xff]
      %v523 = vld [vmem:[#allocation2 + $0x98] sm:$0xff]
      %v524 = vld [vmem:[#allocation2 + $0xa0] sm:$0xff]
      %v525 = vld [vmem:[#allocation2 + $0xa8] sm:$0xff]
      %v526 = vld [vmem:[#allocation2 + $0xb0] sm:$0xff]
      %v527 = vld [vmem:[#allocation2 + $0xb8] sm:$0xff]
      %v528 = vld [vmem:[#allocation2 + $0xc0] sm:$0xff]
      %v529 = vld [vmem:[#allocation2 + $0xc8] sm:$0xff]
      %v530 = vld [vmem:[#allocation2 + $0xd0] sm:$0xff]
      %v531 = vld [vmem:[#allocation2 + $0xd8] sm:$0xff]
      %v532 = vld [vmem:[#allocation2 + $0xe0] sm:$0xff]
      %v533 = vld [vmem:[#allocation2 + $0xe8] sm:$0xff]
      %v534 = vld [vmem:[#allocation2 + $0xf0] sm:$0xff]
      %v535 = vld [vmem:[#allocation2 + $0xf8] sm:$0xff]
      %v536 = vld [vmem:[%s2] sm:$0x1]
      %v538 = vlaneseq
      %v539 = vshrl.u32 %v538, 7
      %v540 = vsub.s32 0, %v539
      %v541 = vrot.slane %v536, %v540
      %v543 = vadd.f32 %v504, %v541
      %v544 = vadd.f32 %v505, %v541
      %v545 = vadd.f32 %v506, %v541
      %v546 = vadd.f32 %v507, %v541
      %v547 = vadd.f32 %v508, %v541
      %v548 = vadd.f32 %v509, %v541
      %v549 = vadd.f32 %v510, %v541
      %v550 = vadd.f32 %v511, %v541
      %v551 = vadd.f32 %v512, %v541
      %v552 = vadd.f32 %v513, %v541
      %v553 = vadd.f32 %v514, %v541
      %v554 = vadd.f32 %v515, %v541
      %v555 = vadd.f32 %v516, %v541
      %v556 = vadd.f32 %v517, %v541
      %v557 = vadd.f32 %v518, %v541
      %v558 = vadd.f32 %v519, %v541
      %v559 = vadd.f32 %v520, %v541
      %v560 = vadd.f32 %v521, %v541
      %v561 = vadd.f32 %v522, %v541
      %v562 = vadd.f32 %v523, %v541
      %v563 = vadd.f32 %v524, %v541
      %v564 = vadd.f32 %v525, %v541
      %v565 = vadd.f32 %v526, %v541
      %v566 = vadd.f32 %v527, %v541
      %v567 = vadd.f32 %v528, %v541
      %v568 = vadd.f32 %v529, %v541
      %v569 = vadd.f32 %v530, %v541
      %v570 = vadd.f32 %v531, %v541
      %v571 = vadd.f32 %v532, %v541
      %v572 = vadd.f32 %v533, %v541
      %v573 = vadd.f32 %v534, %v541
      %v574 = vadd.f32 %v535, %v541
      %v575 = vsub.f32 0.0, %v543
      %v576 = vsub.f32 0.0, %v544
      %v577 = vsub.f32 0.0, %v545
      %v578 = vsub.f32 0.0, %v546
      %v579 = vsub.f32 0.0, %v547
      %v580 = vsub.f32 0.0, %v548
      %v581 = vsub.f32 0.0, %v549
      %v582 = vsub.f32 0.0, %v550
      %v583 = vsub.f32 0.0, %v551
      %v584 = vsub.f32 0.0, %v552
      %v585 = vsub.f32 0.0, %v553
      %v586 = vsub.f32 0.0, %v554
      %v587 = vsub.f32 0.0, %v555
      %v588 = vsub.f32 0.0, %v556
      %v589 = vsub.f32 0.0, %v557
      %v590 = vsub.f32 0.0, %v558
      %v591 = vsub.f32 0.0, %v559
      %v592 = vsub.f32 0.0, %v560
      %v593 = vsub.f32 0.0, %v561
      %v594 = vsub.f32 0.0, %v562
      %v595 = vsub.f32 0.0, %v563
      %v596 = vsub.f32 0.0, %v564
      %v597 = vsub.f32 0.0, %v565
      %v598 = vsub.f32 0.0, %v566
      %v599 = vsub.f32 0.0, %v567
      %v600 = vsub.f32 0.0, %v568
      %v601 = vsub.f32 0.0, %v569
      %v602 = vsub.f32 0.0, %v570
      %v603 = vsub.f32 0.0, %v571
      %v604 = vsub.f32 0.0, %v572
      %v605 = vsub.f32 0.0, %v573
      %v606 = vsub.f32 0.0, %v574
      %v607 = vmul.f32 %v575, 1.442695
      %v608 = vpow.pop %v607
      %v609 = vmul.f32 %v576, 1.442695
      %v610 = vpow.pop %v609
      %v611 = vmul.f32 %v577, 1.442695
      %v612 = vpow.pop %v611
      %v613 = vmul.f32 %v578, 1.442695
      %v614 = vpow.pop %v613
      %v615 = vmul.f32 %v579, 1.442695
      %v616 = vpow.pop %v615
      %v617 = vmul.f32 %v580, 1.442695
      %v618 = vpow.pop %v617
      %v619 = vmul.f32 %v581, 1.442695
      %v620 = vpow.pop %v619
      %v621 = vmul.f32 %v582, 1.442695
      %v622 = vpow.pop %v621
      %v623 = vmul.f32 %v583, 1.442695
      %v624 = vpow.pop %v623
      %v625 = vmul.f32 %v584, 1.442695
      %v626 = vpow.pop %v625
      %v627 = vmul.f32 %v585, 1.442695
      %v628 = vpow.pop %v627
      %v629 = vmul.f32 %v586, 1.442695
      %v630 = vpow.pop %v629
      %v631 = vmul.f32 %v587, 1.442695
      %v632 = vpow.pop %v631
      %v633 = vmul.f32 %v588, 1.442695
      %v634 = vpow.pop %v633
      %v635 = vmul.f32 %v589, 1.442695
      %v636 = vpow.pop %v635
      %v637 = vmul.f32 %v590, 1.442695
      %v638 = vpow.pop %v637
      %v639 = vmul.f32 %v591, 1.442695
      %v640 = vpow.pop %v639
      %v641 = vmul.f32 %v592, 1.442695
      %v642 = vpow.pop %v641
      %v643 = vmul.f32 %v593, 1.442695
      %v644 = vpow.pop %v643
      %v645 = vmul.f32 %v594, 1.442695
      %v646 = vpow.pop %v645
      %v647 = vmul.f32 %v595, 1.442695
      %v648 = vpow.pop %v647
      %v649 = vmul.f32 %v596, 1.442695
      %v650 = vpow.pop %v649
      %v651 = vmul.f32 %v597, 1.442695
      %v652 = vpow.pop %v651
      %v653 = vmul.f32 %v598, 1.442695
      %v654 = vpow.pop %v653
      %v655 = vmul.f32 %v599, 1.442695
      %v656 = vpow.pop %v655
      %v657 = vmul.f32 %v600, 1.442695
      %v658 = vpow.pop %v657
      %v659 = vmul.f32 %v601, 1.442695
      %v660 = vpow.pop %v659
      %v661 = vmul.f32 %v602, 1.442695
      %v662 = vpow.pop %v661
      %v663 = vmul.f32 %v603, 1.442695
      %v664 = vpow.pop %v663
      %v665 = vmul.f32 %v604, 1.442695
      %v666 = vpow.pop %v665
      %v667 = vmul.f32 %v605, 1.442695
      %v668 = vpow.pop %v667
      %v669 = vmul.f32 %v606, 1.442695
      %v670 = vpow.pop %v669
      %v671 = vadd.f32 %v608, 1.0
      %v672 = vadd.f32 %v610, 1.0
      %v673 = vadd.f32 %v612, 1.0
      %v674 = vadd.f32 %v614, 1.0
      %v675 = vadd.f32 %v616, 1.0
      %v676 = vadd.f32 %v618, 1.0
      %v677 = vadd.f32 %v620, 1.0
      %v678 = vadd.f32 %v622, 1.0
      %v679 = vadd.f32 %v624, 1.0
      %v680 = vadd.f32 %v626, 1.0
      %v681 = vadd.f32 %v628, 1.0
      %v682 = vadd.f32 %v630, 1.0
      %v683 = vadd.f32 %v632, 1.0
      %v684 = vadd.f32 %v634, 1.0
      %v685 = vadd.f32 %v636, 1.0
      %v686 = vadd.f32 %v638, 1.0
      %v687 = vadd.f32 %v640, 1.0
      %v688 = vadd.f32 %v642, 1.0
      %v689 = vadd.f32 %v644, 1.0
      %v690 = vadd.f32 %v646, 1.0
      %v691 = vadd.f32 %v648, 1.0
      %v692 = vadd.f32 %v650, 1.0
      %v693 = vadd.f32 %v652, 1.0
      %v694 = vadd.f32 %v654, 1.0
      %v695 = vadd.f32 %v656, 1.0
      %v696 = vadd.f32 %v658, 1.0
      %v697 = vadd.f32 %v660, 1.0
      %v698 = vadd.f32 %v662, 1.0
      %v699 = vadd.f32 %v664, 1.0
      %v700 = vadd.f32 %v666, 1.0
      %v701 = vadd.f32 %v668, 1.0
      %v702 = vadd.f32 %v670, 1.0
      %v703 = vrcp.pop %v671
      %v704 = vrcp.pop %v672
      %v705 = vrcp.pop %v673
      %v706 = vrcp.pop %v674
      %v707 = vrcp.pop %v675
      %v708 = vrcp.pop %v676
      %v709 = vrcp.pop %v677
      %v710 = vrcp.pop %v678
      %v711 = vrcp.pop %v679
      %v712 = vrcp.pop %v680
      %v713 = vrcp.pop %v681
      %v714 = vrcp.pop %v682
      %v715 = vrcp.pop %v683
      %v716 = vrcp.pop %v684
      %v717 = vrcp.pop %v685
      %v718 = vrcp.pop %v686
      %v719 = vrcp.pop %v687
      %v720 = vrcp.pop %v688
      %v721 = vrcp.pop %v689
      %v722 = vrcp.pop %v690
      %v723 = vrcp.pop %v691
      %v724 = vrcp.pop %v692
      %v725 = vrcp.pop %v693
      %v726 = vrcp.pop %v694
      %v727 = vrcp.pop %v695
      %v728 = vrcp.pop %v696
      %v729 = vrcp.pop %v697
      %v730 = vrcp.pop %v698
      %v731 = vrcp.pop %v699
      %v732 = vrcp.pop %v700
      %v733 = vrcp.pop %v701
      %v734 = vrcp.pop %v702
      %v735 = vmul.f32 %v543, %v703
      %v736 = vmul.f32 %v544, %v704
      %v737 = vmul.f32 %v545, %v705
      %v738 = vmul.f32 %v546, %v706
      %v739 = vmul.f32 %v547, %v707
      %v740 = vmul.f32 %v548, %v708
      %v741 = vmul.f32 %v549, %v709
      %v742 = vmul.f32 %v550, %v710
      %v743 = vmul.f32 %v551, %v711
      %v744 = vmul.f32 %v552, %v712
      %v745 = vmul.f32 %v553, %v713
      %v746 = vmul.f32 %v554, %v714
      %v747 = vmul.f32 %v555, %v715
      %v748 = vmul.f32 %v556, %v716
      %v749 = vmul.f32 %v557, %v717
      %v750 = vmul.f32 %v558, %v718
      %v751 = vmul.f32 %v559, %v719
      %v752 = vmul.f32 %v560, %v720
      %v753 = vmul.f32 %v561, %v721
      %v754 = vmul.f32 %v562, %v722
      %v755 = vmul.f32 %v563, %v723
      %v756 = vmul.f32 %v564, %v724
      %v757 = vmul.f32 %v565, %v725
      %v758 = vmul.f32 %v566, %v726
      %v759 = vmul.f32 %v567, %v727
      %v760 = vmul.f32 %v568, %v728
      %v761 = vmul.f32 %v569, %v729
      %v762 = vmul.f32 %v570, %v730
      %v763 = vmul.f32 %v571, %v731
      %v764 = vmul.f32 %v572, %v732
      %v765 = vmul.f32 %v573, %v733
      %v766 = vmul.f32 %v574, %v734
      %v767 = vpack.c.bf16 %v736, %v735
      %v768 = vpack.c.bf16 %v738, %v737
      %v769 = vpack.c.bf16 %v740, %v739
      %v770 = vpack.c.bf16 %v742, %v741
      %v771 = vpack.c.bf16 %v744, %v743
      %v772 = vpack.c.bf16 %v746, %v745
      %v773 = vpack.c.bf16 %v748, %v747
      %v774 = vpack.c.bf16 %v750, %v749
      %v775 = vpack.c.bf16 %v752, %v751
      %v776 = vpack.c.bf16 %v754, %v753
      %v777 = vpack.c.bf16 %v756, %v755
      %v778 = vpack.c.bf16 %v758, %v757
      %v779 = vpack.c.bf16 %v760, %v759
      %v780 = vpack.c.bf16 %v762, %v761
      %v781 = vpack.c.bf16 %v764, %v763
      %v782 = vpack.c.bf16 %v766, %v765
      %v799 = vunpack.c.l.b16 %v767
      %v800 = vunpack.c.h.b16 %v767
      %v801 = vunpack.c.l.b16 %v768
      %v802 = vunpack.c.h.b16 %v768
      %v803 = vunpack.c.l.b16 %v769
      %v804 = vunpack.c.h.b16 %v769
      %v805 = vunpack.c.l.b16 %v770
      %v806 = vunpack.c.h.b16 %v770
      %v807 = vunpack.c.l.b16 %v771
      %v808 = vunpack.c.h.b16 %v771
      %v809 = vunpack.c.l.b16 %v772
      %v810 = vunpack.c.h.b16 %v772
      %v811 = vunpack.c.l.b16 %v773
      %v812 = vunpack.c.h.b16 %v773
      %v813 = vunpack.c.l.b16 %v774
      %v814 = vunpack.c.h.b16 %v774
      %v815 = vunpack.c.l.b16 %v775
      %v816 = vunpack.c.h.b16 %v775
      %v817 = vunpack.c.l.b16 %v776
      %v818 = vunpack.c.h.b16 %v776
      %v819 = vunpack.c.l.b16 %v777
      %v820 = vunpack.c.h.b16 %v777
      %v821 = vunpack.c.l.b16 %v778
      %v822 = vunpack.c.h.b16 %v778
      %v823 = vunpack.c.l.b16 %v779
      %v824 = vunpack.c.h.b16 %v779
      %v825 = vunpack.c.l.b16 %v780
      %v826 = vunpack.c.h.b16 %v780
      %v827 = vunpack.c.l.b16 %v781
      %v828 = vunpack.c.h.b16 %v781
      %v829 = vunpack.c.l.b16 %v782
      %v830 = vunpack.c.h.b16 %v782
      %v831 = vpack.c.b16 %v799, %v799
      %v832 = vpack.c.b16 %v800, %v800
      %v833 = vpack.c.b16 %v801, %v801
      %v834 = vpack.c.b16 %v802, %v802
      %v835 = vpack.c.b16 %v803, %v803
      %v836 = vpack.c.b16 %v804, %v804
      %v837 = vpack.c.b16 %v805, %v805
      %v838 = vpack.c.b16 %v806, %v806
      %v839 = vpack.c.b16 %v807, %v807
      %v840 = vpack.c.b16 %v808, %v808
      %v841 = vpack.c.b16 %v809, %v809
      %v842 = vpack.c.b16 %v810, %v810
      %v843 = vpack.c.b16 %v811, %v811
      %v844 = vpack.c.b16 %v812, %v812
      %v845 = vpack.c.b16 %v813, %v813
      %v846 = vpack.c.b16 %v814, %v814
      %v847 = vpack.c.b16 %v815, %v815
      %v848 = vpack.c.b16 %v816, %v816
      %v849 = vpack.c.b16 %v817, %v817
      %v850 = vpack.c.b16 %v818, %v818
      %v851 = vpack.c.b16 %v819, %v819
      %v852 = vpack.c.b16 %v820, %v820
      %v853 = vpack.c.b16 %v821, %v821
      %v854 = vpack.c.b16 %v822, %v822
      %v855 = vpack.c.b16 %v823, %v823
      %v856 = vpack.c.b16 %v824, %v824
      %v857 = vpack.c.b16 %v825, %v825
      %v858 = vpack.c.b16 %v826, %v826
      %v859 = vpack.c.b16 %v827, %v827
      %v860 = vpack.c.b16 %v828, %v828
      %v861 = vpack.c.b16 %v829, %v829
      %v862 = vpack.c.b16 %v830, %v830
      %895 = vst [vmem:[#allocation3] sm:$0xf] %v831
      %896 = vst [vmem:[#allocation3 + $0x4] sm:$0xf] %v832
      %897 = vst [vmem:[#allocation3 + $0x8] sm:$0xf] %v833
      %898 = vst [vmem:[#allocation3 + $0xc] sm:$0xf] %v834
      %899 = vst [vmem:[#allocation3 + $0x10] sm:$0xf] %v835
      %900 = vst [vmem:[#allocation3 + $0x14] sm:$0xf] %v836
      %901 = vst [vmem:[#allocation3 + $0x18] sm:$0xf] %v837
      %902 = vst [vmem:[#allocation3 + $0x1c] sm:$0xf] %v838
      %903 = vst [vmem:[#allocation3 + $0x20] sm:$0xf] %v839
      %904 = vst [vmem:[#allocation3 + $0x24] sm:$0xf] %v840
      %905 = vst [vmem:[#allocation3 + $0x28] sm:$0xf] %v841
      %906 = vst [vmem:[#allocation3 + $0x2c] sm:$0xf] %v842
      %907 = vst [vmem:[#allocation3 + $0x30] sm:$0xf] %v843
      %908 = vst [vmem:[#allocation3 + $0x34] sm:$0xf] %v844
      %909 = vst [vmem:[#allocation3 + $0x38] sm:$0xf] %v845
      %910 = vst [vmem:[#allocation3 + $0x3c] sm:$0xf] %v846
      %911 = vst [vmem:[#allocation3 + $0x40] sm:$0xf] %v847
      %912 = vst [vmem:[#allocation3 + $0x44] sm:$0xf] %v848
      %913 = vst [vmem:[#allocation3 + $0x48] sm:$0xf] %v849
      %914 = vst [vmem:[#allocation3 + $0x4c] sm:$0xf] %v850
      %915 = vst [vmem:[#allocation3 + $0x50] sm:$0xf] %v851
      %916 = vst [vmem:[#allocation3 + $0x54] sm:$0xf] %v852
      %917 = vst [vmem:[#allocation3 + $0x58] sm:$0xf] %v853
      %918 = vst [vmem:[#allocation3 + $0x5c] sm:$0xf] %v854
      %919 = vst [vmem:[#allocation3 + $0x60] sm:$0xf] %v855
      %920 = vst [vmem:[#allocation3 + $0x64] sm:$0xf] %v856
      %921 = vst [vmem:[#allocation3 + $0x68] sm:$0xf] %v857
      %922 = vst [vmem:[#allocation3 + $0x6c] sm:$0xf] %v858
      %923 = vst [vmem:[#allocation3 + $0x70] sm:$0xf] %v859
      %924 = vst [vmem:[#allocation3 + $0x74] sm:$0xf] %v860
      %925 = vst [vmem:[#allocation3 + $0x78] sm:$0xf] %v861
      %926 = vst [vmem:[#allocation3 + $0x7c] sm:$0xf] %v862
    $region21: #{conv_fwd.1} parent=1 // pred_fallthru
      _
    // Predicated region
    $region22: #{conv_fwd.1} parent=1 // pred_check
      _
    $region23: #{conv_fwd.1} parent=1 // pred_check_branch
      %928 = sbr.rel (0) target = $region25
    $region24: #{conv_fwd.1} parent=1 // pred_region
      %s930 = ssub.s32 2048, 2048
      %931 = vsyncadd [#allocation4], %s930
      %s932 = sshll.u32 [#allocation3], 4
      %s933 = int_to_ptr.vmem [resolvable:$true] %s932
      %938 = dma.vmem_to_hbm [thread:$0]  %s933, 2048, %s3, [#allocation4], 64, 64, 4
    $region25: #{conv_fwd.1} parent=1 // pred_fallthru
      _
    // Predicated region
    $region26: #{conv_fwd.1} parent=1 // pred_check
      _
    $region27: #{conv_fwd.1} parent=1 // pred_check_branch
      %940 = sbr.rel (0) target = $region29
    $region28: #{conv_fwd.1} parent=1 // pred_region
      %941 = dma.done [#allocation4], 2048
    $region29: #{conv_fwd.1} parent=1 // pred_fallthru
      _
    %942 = vsyncpa [#allocation4], 1

</llo_original>
